<compile_context>
chip_gen: v7x
topology: tpu7x:2x2x1
jax: 0.10.0
libtpu: 0.0.40
codegen_flags: <defaults>
</compile_context>

<pallas_src>
import jax
import jax.numpy as jnp
from jax.experimental import pallas as pl
from jax.experimental.pallas import tpu as pltpu


def _cfg_denoiser_kernel(scales_ref, z_ref, cc_cond_ref, cc_unc_ref, ctxT_ref,
                         w_zT_ref, w_ccT_ref, w_ctxT_ref, o_ref):
    """One lane-dense spatial tile of the folded 3-branch CFG denoiser.

    scales_ref  : SMEM (3,)      f32 -> [text_cfg_scale, image_cfg_scale, sigma]
    z_ref       : VMEM (C, TP)   latent tile, channel-first (P on lanes)
    cc_cond_ref : VMEM (C, TP)   cond   c_concat tile
    cc_unc_ref  : VMEM (C, TP)   uncond c_concat tile
    ctxT_ref    : VMEM (2, D, S) crossattn contexts (cond, uncond), transposed
    w_zT_ref    : VMEM (Cout, C) 1x1-conv weight rows for z, transposed
    w_ccT_ref   : VMEM (Cout, C) 1x1-conv weight rows for c_concat, transposed
    w_ctxT_ref  : VMEM (Cout, D) context-projection weight, transposed
    o_ref       : VMEM (Cout, TP) CFG-combined output tile (out^T)
    """
    t = scales_ref[0]          # text_cfg_scale
    i = scales_ref[1]          # image_cfg_scale
    sig = scales_ref[2]        # sigma (identical for all 3 branches)

    # sigma modulation, computed once (was 3x before)
    c_out = 1.0 / jnp.sqrt(sig * sig + 1.0)

    # CFG combine  t*out_cond + (i - t)*out_img + (1 - i)*out_unc  folded into
    # the tiny per-channel weights:
    #   z         appears with coefficient t + (i - t) + (1 - i) = 1
    #   cc_cond   appears with coefficient i
    #   cc_unc    appears with coefficient 1 - i
    # and the shared sigma scale c_out is folded in as well, so no full-tile
    # VPU multiplies remain on the hot path.
    w_z = c_out * w_zT_ref[...]                      # (Cout, C)
    w_cc_c = (c_out * i) * w_ccT_ref[...]            # (Cout, C)
    w_cc_u = (c_out * (1.0 - i)) * w_ccT_ref[...]    # (Cout, C)

    acc = jnp.dot(w_z, z_ref[...], preferred_element_type=jnp.float32)
    acc = acc + jnp.dot(w_cc_c, cc_cond_ref[...],
                        preferred_element_type=jnp.float32)
    acc = acc + jnp.dot(w_cc_u, cc_unc_ref[...],
                        preferred_element_type=jnp.float32)          # (Cout, TP)

    # context bias: only 2 distinct crossattn contexts (cond, uncond);
    # branch biases combine with coefficients t and (1 - t).
    m_cond = jnp.mean(ctxT_ref[0], axis=1, keepdims=True)            # (D, 1)
    m_unc = jnp.mean(ctxT_ref[1], axis=1, keepdims=True)             # (D, 1)
    m = t * m_cond + (1.0 - t) * m_unc                               # (D, 1)
    bias = jnp.dot(w_ctxT_ref[...], m,
                   preferred_element_type=jnp.float32)               # (Cout, 1)

    o_ref[...] = (acc + bias).astype(o_ref.dtype)


def _pick_spatial_tile(P):
    for tp in (2048, 1024, 512, 256, 128):
        if P % tp == 0:
            return tp
    return P


def cfg_denoiser(z, sigma, cond, uncond, text_cfg_scale, image_cfg_scale,
                 w_conv, w_ctx):
    """JAX wrapper mirroring CFGDenoiser.forward.

    z:      (1, C, H, W)  NCHW latent
    sigma:  (1,)
    cond / uncond: dicts with 'c_crossattn': [(1, S, D)], 'c_concat': [(1, C, H, W)]
    w_conv: (2C, Cout) synthetic inner-model 1x1-conv weight ([z ; c_concat] rows)
    w_ctx:  (D, Cout)  synthetic inner-model context-projection weight
    """
    _, C, H, W = z.shape
    P = H * W
    S, D = cond["c_crossattn"][0].shape[1:]
    Cout = w_conv.shape[1]

    # Channel-first, spatially-flattened views: (C, H*W) is a plain reshape of
    # NCHW, so P lands on the lane axis with NO transpose, and z is read from
    # HBM exactly once (no einops.repeat / branch duplication).
    z2d = z.reshape(C, P)
    cc_cond = cond["c_concat"][0].reshape(C, P)
    cc_unc = uncond["c_concat"][0].reshape(C, P)

    # De-duplicated crossattn contexts, transposed so the in-kernel mean is a
    # lane reduction and the bias comes out as a (Cout, 1) column. Tiny arrays.
    ctxT = jnp.stack([cond["c_crossattn"][0][0].T,
                      uncond["c_crossattn"][0][0].T], axis=0)        # (2, D, S)

    # Tiny transposed weights for the out^T = W^T @ x^T formulation.
    w_zT = w_conv[:C].T      # (Cout, C)  rows acting on z
    w_ccT = w_conv[C:].T     # (Cout, C)  rows acting on c_concat
    w_ctxT = w_ctx.T         # (Cout, D)

    scales = jnp.concatenate(
        [jnp.array([text_cfg_scale, image_cfg_scale], dtype=jnp.float32),
         sigma.reshape(1).astype(jnp.float32)])                      # (3,)

    tp = _pick_spatial_tile(P)
    grid = (P // tp,)

    out_t = pl.pallas_call(
        _cfg_denoiser_kernel,
        out_shape=jax.ShapeDtypeStruct((Cout, P), jnp.float32),
        grid=grid,
        in_specs=[
            pl.BlockSpec(memory_space=pltpu.MemorySpace.SMEM),       # scales
            pl.BlockSpec((C, tp), lambda i: (0, i)),                 # z
            pl.BlockSpec((C, tp), lambda i: (0, i)),                 # cc_cond
            pl.BlockSpec((C, tp), lambda i: (0, i)),                 # cc_unc
            pl.BlockSpec((2, D, S), lambda i: (0, 0, 0)),            # ctxT
            pl.BlockSpec((Cout, C), lambda i: (0, 0)),               # w_zT
            pl.BlockSpec((Cout, C), lambda i: (0, 0)),               # w_ccT
            pl.BlockSpec((Cout, D), lambda i: (0, 0)),               # w_ctxT
        ],
        out_specs=pl.BlockSpec((Cout, tp), lambda i: (0, i)),
        compiler_params=pltpu.CompilerParams(
            dimension_semantics=("parallel",)),
    )(scales, z2d, cc_cond, cc_unc, ctxT, w_zT, w_ccT, w_ctxT)

    # (Cout, H*W) reshapes straight back to NCHW — no trailing transpose.
    return out_t.reshape(1, Cout, H, W)


def _reference(z, sigma, cond, uncond, t_scale, i_scale, w_conv, w_ctx):
    """Pure-jnp reference: explicit 3-branch inner model + CFG combine."""
    C, H, W = z.shape[1:]
    cfg_z = jnp.broadcast_to(z, (3,) + z.shape[1:])
    sig = jnp.broadcast_to(sigma, (3,)).astype(jnp.float32)
    ca = jnp.concatenate([cond["c_crossattn"][0], uncond["c_crossattn"][0],
                          uncond["c_crossattn"][0]], axis=0)
    cc = jnp.concatenate([cond["c_concat"][0], cond["c_concat"][0],
                          uncond["c_concat"][0]], axis=0)
    x = jnp.concatenate([cfg_z, cc], axis=1)                              # (3,2C,H,W)
    x = jnp.transpose(x, (0, 2, 3, 1)).reshape(3, H * W, 2 * C)
    h = jnp.einsum("npk,kc->npc", x, w_conv)
    c_out = (1.0 / jnp.sqrt(sig * sig + 1.0))[:, None, None]
    bias = jnp.einsum("nd,dc->nc", ca.mean(axis=1), w_ctx)[:, None, :]
    outs = h * c_out + bias                                               # (3,P,C)
    o_cond, o_img, o_unc = outs[0], outs[1], outs[2]
    o = o_unc + t_scale * (o_cond - o_img) + i_scale * (o_img - o_unc)
    return jnp.transpose(o.reshape(H, W, C), (2, 0, 1))[None]


if __name__ == "__main__":
    key = jax.random.PRNGKey(0)
    k_z, k_sig, k_ca_c, k_ca_u, k_cc_c, k_cc_u, k_w1, k_w2 = jax.random.split(key, 8)

    C, H, W = 4, 16, 16     # latent channels / spatial
    S, D = 8, 32            # crossattn seq / hidden

    z = jax.random.normal(k_z, (1, C, H, W), dtype=jnp.float32)
    sigma = jax.random.uniform(k_sig, (1,), dtype=jnp.float32) + 0.5
    cond = {
        "c_crossattn": [jax.random.normal(k_ca_c, (1, S, D), dtype=jnp.float32)],
        "c_concat": [jax.random.normal(k_cc_c, (1, C, H, W), dtype=jnp.float32)],
    }
    uncond = {
        "c_crossattn": [jax.random.normal(k_ca_u, (1, S, D), dtype=jnp.float32)],
        "c_concat": [jax.random.normal(k_cc_u, (1, C, H, W), dtype=jnp.float32)],
    }
    text_cfg_scale = 7.5
    image_cfg_scale = 1.5

    # deterministic synthetic inner-model parameters
    # TODO(synk): the original wraps an arbitrary UNet `inner_model`; here it is
    # a synthetic 1x1-conv + context-bias model so the CFG hot path is kernelized.
    w_conv = 0.1 * jax.random.normal(k_w1, (2 * C, C), dtype=jnp.float32)
    w_ctx = 0.1 * jax.random.normal(k_w2, (D, C), dtype=jnp.float32)

    out = cfg_denoiser(z, sigma, cond, uncond, text_cfg_scale, image_cfg_scale,
                       w_conv, w_ctx)
    out = jax.block_until_ready(out)

    ref = _reference(z, sigma, cond, uncond, text_cfg_scale, image_cfg_scale,
                     w_conv, w_ctx)
    assert out.shape == (1, C, H, W)
    assert jnp.allclose(out, ref, atol=1e-4, rtol=1e-4)

    print("KERNEL_OK")
</pallas_src>

<mosaic_0001>
module attributes {stable_mosaic.version = 11 : i64} {
  func.func @_cfg_denoiser_kernel(%arg0: i32, %arg1: memref<3xf32, #tpu.memory_space<smem>>, %arg2: memref<4x256xf32, #tpu.memory_space<vmem>>, %arg3: memref<4x256xf32, #tpu.memory_space<vmem>>, %arg4: memref<4x256xf32, #tpu.memory_space<vmem>>, %arg5: memref<2x32x8xf32, #tpu.memory_space<vmem>>, %arg6: memref<4x4xf32, #tpu.memory_space<vmem>>, %arg7: memref<4x4xf32, #tpu.memory_space<vmem>>, %arg8: memref<4x32xf32, #tpu.memory_space<vmem>>, %arg9: memref<4x256xf32, #tpu.memory_space<vmem>>) attributes {dimension_semantics = [#tpu.dimension_semantics<parallel>], iteration_bounds = array<i64: 1>, scalar_prefetch = 0 : i64, scratch_operands = 0 : i64, tpu.core_type = #tpu.core_type<tc>, window_params = [{transform_indices = @transform_0, window_bounds = array<i64: 3>}, {transform_indices = @transform_1, window_bounds = array<i64: 4, 256>}, {transform_indices = @transform_2, window_bounds = array<i64: 4, 256>}, {transform_indices = @transform_3, window_bounds = array<i64: 4, 256>}, {pipeline_mode = #tpu.pipeline_mode<synchronous>, transform_indices = @transform_4, window_bounds = array<i64: 2, 32, 8>}, {pipeline_mode = #tpu.pipeline_mode<synchronous>, transform_indices = @transform_5, window_bounds = array<i64: 4, 4>}, {pipeline_mode = #tpu.pipeline_mode<synchronous>, transform_indices = @transform_6, window_bounds = array<i64: 4, 4>}, {pipeline_mode = #tpu.pipeline_mode<synchronous>, transform_indices = @transform_7, window_bounds = array<i64: 4, 32>}, {transform_indices = @transform_8, window_bounds = array<i64: 4, 256>}]} {
    %c0 = arith.constant 0 : index
    %0 = memref.load %arg1[%c0] : memref<3xf32, #tpu.memory_space<smem>>
    %c1 = arith.constant 1 : index
    %1 = memref.load %arg1[%c1] : memref<3xf32, #tpu.memory_space<smem>>
    %c2 = arith.constant 2 : index
    %2 = memref.load %arg1[%c2] : memref<3xf32, #tpu.memory_space<smem>>
    %3 = arith.mulf %2, %2 : f32
    %cst = arith.constant 1.000000e+00 : f32
    %4 = arith.addf %3, %cst : f32
    %5 = math.sqrt %4 : f32
    %cst_0 = arith.constant 1.000000e+00 : f32
    %6 = arith.divf %cst_0, %5 : f32
    %c0_1 = arith.constant 0 : index
    %c0_2 = arith.constant 0 : index
    %7 = vector.load %arg6[%c0_1, %c0_2] : memref<4x4xf32, #tpu.memory_space<vmem>>, vector<4x4xf32>
    %8 = vector.broadcast %6 : f32 to vector<4x4xf32>
    %9 = arith.mulf %8, %7 : vector<4x4xf32>
    %10 = arith.mulf %6, %1 : f32
    %c0_3 = arith.constant 0 : index
    %c0_4 = arith.constant 0 : index
    %11 = vector.load %arg7[%c0_3, %c0_4] : memref<4x4xf32, #tpu.memory_space<vmem>>, vector<4x4xf32>
    %12 = vector.broadcast %10 : f32 to vector<4x4xf32>
    %13 = arith.mulf %12, %11 : vector<4x4xf32>
    %cst_5 = arith.constant 1.000000e+00 : f32
    %14 = arith.subf %cst_5, %1 : f32
    %15 = arith.mulf %6, %14 : f32
    %c0_6 = arith.constant 0 : index
    %c0_7 = arith.constant 0 : index
    %16 = vector.load %arg7[%c0_6, %c0_7] : memref<4x4xf32, #tpu.memory_space<vmem>>, vector<4x4xf32>
    %17 = vector.broadcast %15 : f32 to vector<4x4xf32>
    %18 = arith.mulf %17, %16 : vector<4x4xf32>
    %c0_8 = arith.constant 0 : index
    %c0_9 = arith.constant 0 : index
    %19 = vector.load %arg2[%c0_8, %c0_9] : memref<4x256xf32, #tpu.memory_space<vmem>>, vector<4x256xf32>
    %cst_10 = arith.constant dense<0.000000e+00> : vector<4x256xf32>
    %20 = tpu.matmul %9, %19, %cst_10 {dimension_numbers = #tpu.dot_dimension_numbers<[1], [0], [0], [1], [0, 0, 1, 1], [], []>} : vector<4x4xf32>, vector<4x256xf32>, vector<4x256xf32> -> vector<4x256xf32>
    %c0_11 = arith.constant 0 : index
    %c0_12 = arith.constant 0 : index
    %21 = vector.load %arg3[%c0_11, %c0_12] : memref<4x256xf32, #tpu.memory_space<vmem>>, vector<4x256xf32>
    %cst_13 = arith.constant dense<0.000000e+00> : vector<4x256xf32>
    %22 = tpu.matmul %13, %21, %cst_13 {dimension_numbers = #tpu.dot_dimension_numbers<[1], [0], [0], [1], [0, 0, 1, 1], [], []>} : vector<4x4xf32>, vector<4x256xf32>, vector<4x256xf32> -> vector<4x256xf32>
    %23 = arith.addf %20, %22 : vector<4x256xf32>
    %c0_14 = arith.constant 0 : index
    %c0_15 = arith.constant 0 : index
    %24 = vector.load %arg4[%c0_14, %c0_15] : memref<4x256xf32, #tpu.memory_space<vmem>>, vector<4x256xf32>
    %cst_16 = arith.constant dense<0.000000e+00> : vector<4x256xf32>
    %25 = tpu.matmul %18, %24, %cst_16 {dimension_numbers = #tpu.dot_dimension_numbers<[1], [0], [0], [1], [0, 0, 1, 1], [], []>} : vector<4x4xf32>, vector<4x256xf32>, vector<4x256xf32> -> vector<4x256xf32>
    %26 = arith.addf %23, %25 : vector<4x256xf32>
    %c0_17 = arith.constant 0 : index
    %c0_18 = arith.constant 0 : index
    %c0_19 = arith.constant 0 : index
    %27 = vector.load %arg5[%c0_17, %c0_18, %c0_19] : memref<2x32x8xf32, #tpu.memory_space<vmem>>, vector<1x32x8xf32>
    %28 = vector.shape_cast %27 : vector<1x32x8xf32> to vector<32x8xf32>
    %cst_20 = arith.constant dense<0.000000e+00> : vector<32xf32>
    %29 = vector.multi_reduction <add>, %28, %cst_20 [1] : vector<32x8xf32> to vector<32xf32>
    %30 = vector.shape_cast %29 : vector<32xf32> to vector<32x1xf32>
    %cst_21 = arith.constant 8.000000e+00 : f32
    %31 = vector.broadcast %cst_21 : f32 to vector<32x1xf32>
    %32 = arith.divf %30, %31 : vector<32x1xf32>
    %c1_22 = arith.constant 1 : index
    %c0_23 = arith.constant 0 : index
    %c0_24 = arith.constant 0 : index
    %33 = vector.load %arg5[%c1_22, %c0_23, %c0_24] : memref<2x32x8xf32, #tpu.memory_space<vmem>>, vector<1x32x8xf32>
    %34 = vector.shape_cast %33 : vector<1x32x8xf32> to vector<32x8xf32>
    %cst_25 = arith.constant dense<0.000000e+00> : vector<32xf32>
    %35 = vector.multi_reduction <add>, %34, %cst_25 [1] : vector<32x8xf32> to vector<32xf32>
    %36 = vector.shape_cast %35 : vector<32xf32> to vector<32x1xf32>
    %cst_26 = arith.constant 8.000000e+00 : f32
    %37 = vector.broadcast %cst_26 : f32 to vector<32x1xf32>
    %38 = arith.divf %36, %37 : vector<32x1xf32>
    %39 = vector.broadcast %0 : f32 to vector<32x1xf32>
    %40 = arith.mulf %39, %32 : vector<32x1xf32>
    %cst_27 = arith.constant 1.000000e+00 : f32
    %41 = arith.subf %cst_27, %0 : f32
    %42 = vector.broadcast %41 : f32 to vector<32x1xf32>
    %43 = arith.mulf %42, %38 : vector<32x1xf32>
    %44 = arith.addf %40, %43 : vector<32x1xf32>
    %c0_28 = arith.constant 0 : index
    %c0_29 = arith.constant 0 : index
    %45 = vector.load %arg8[%c0_28, %c0_29] : memref<4x32xf32, #tpu.memory_space<vmem>>, vector<4x32xf32>
    %cst_30 = arith.constant dense<0.000000e+00> : vector<4x1xf32>
    %46 = tpu.matmul %45, %44, %cst_30 {dimension_numbers = #tpu.dot_dimension_numbers<[1], [0], [0], [1], [0, 0, 1, 1], [], []>} : vector<4x32xf32>, vector<32x1xf32>, vector<4x1xf32> -> vector<4x1xf32>
    %47 = vector.broadcast %46 : vector<4x1xf32> to vector<4x256xf32>
    %48 = arith.addf %26, %47 : vector<4x256xf32>
    %c0_31 = arith.constant 0 : index
    %c0_32 = arith.constant 0 : index
    %49 = vector.load %arg9[%c0_31, %c0_32] : memref<4x256xf32, #tpu.memory_space<vmem>>, vector<4x256xf32>
    tpu.vector_store %arg9[%c0_31, %c0_32], %48 {strides = array<i32>} : memref<4x256xf32, #tpu.memory_space<vmem>>, vector<4x256xf32>,
    return
  }
  func.func @transform_0(%arg0: i32) -> i32 {
    %c0_i32 = arith.constant 0 : i32
    %c0_i32_0 = arith.constant 0 : i32
    return %c0_i32 : i32
  }
  func.func @transform_1(%arg0: i32) -> (i32, i32) {
    %c0_i32 = arith.constant 0 : i32
    %c0_i32_0 = arith.constant 0 : i32
    return %c0_i32, %arg0 : i32, i32
  }
  func.func @transform_2(%arg0: i32) -> (i32, i32) {
    %c0_i32 = arith.constant 0 : i32
    %c0_i32_0 = arith.constant 0 : i32
    return %c0_i32, %arg0 : i32, i32
  }
  func.func @transform_3(%arg0: i32) -> (i32, i32) {
    %c0_i32 = arith.constant 0 : i32
    %c0_i32_0 = arith.constant 0 : i32
    return %c0_i32, %arg0 : i32, i32
  }
  func.func @transform_4(%arg0: i32) -> (i32, i32, i32) {
    %c0_i32 = arith.constant 0 : i32
    %c0_i32_0 = arith.constant 0 : i32
    %c0_i32_1 = arith.constant 0 : i32
    %c0_i32_2 = arith.constant 0 : i32
    return %c0_i32, %c0_i32_0, %c0_i32_1 : i32, i32, i32
  }
  func.func @transform_5(%arg0: i32) -> (i32, i32) {
    %c0_i32 = arith.constant 0 : i32
    %c0_i32_0 = arith.constant 0 : i32
    %c0_i32_1 = arith.constant 0 : i32
    return %c0_i32, %c0_i32_0 : i32, i32
  }
  func.func @transform_6(%arg0: i32) -> (i32, i32) {
    %c0_i32 = arith.constant 0 : i32
    %c0_i32_0 = arith.constant 0 : i32
    %c0_i32_1 = arith.constant 0 : i32
    return %c0_i32, %c0_i32_0 : i32, i32
  }
  func.func @transform_7(%arg0: i32) -> (i32, i32) {
    %c0_i32 = arith.constant 0 : i32
    %c0_i32_0 = arith.constant 0 : i32
    %c0_i32_1 = arith.constant 0 : i32
    return %c0_i32, %c0_i32_0 : i32, i32
  }
  func.func @transform_8(%arg0: i32) -> (i32, i32) {
    %c0_i32 = arith.constant 0 : i32
    %c0_i32_0 = arith.constant 0 : i32
    return %c0_i32, %arg0 : i32, i32
  }
}

</mosaic_0001>

<llo_original>
// kernel: tpu_custom_call.1
$region0: #{tpu_custom_call.1}
  #allocation0 [shape = 'u32[]', space=smem, size = 0x4, offset = 0x4, fixed_abs, tag = 'smem constant byte address 0x4 - core index']
  #allocation1 [shape = 'u32[144,128]{1,0:T(1,128)}', space=vmem, size = 0x12000, scoped, tag = 'internal scratch']
  %s0 = inlined_call_operand.vmem [shape: f32[3], index: 0, kind: input, shape index: {}]
  %s1 = inlined_call_operand.vmem [shape: f32[4,256], index: 1, kind: input, shape index: {}]
  %s2 = inlined_call_operand.vmem [shape: f32[4,256], index: 2, kind: input, shape index: {}]
  %s3 = inlined_call_operand.vmem [shape: f32[4,256], index: 3, kind: input, shape index: {}]
  %s4 = inlined_call_operand.vmem [shape: f32[2,32,8], index: 4, kind: input, shape index: {}]
  %s5 = inlined_call_operand.vmem [shape: f32[4,4], index: 5, kind: input, shape index: {}]
  %s6 = inlined_call_operand.vmem [shape: f32[4,4], index: 6, kind: input, shape index: {}]
  %s7 = inlined_call_operand.vmem [shape: f32[4,32], index: 7, kind: input, shape index: {}]
  %s8 = inlined_call_operand.hbm [shape: f32[4,256], index: 8, kind: output, shape index: {}]
  %s9 = sld [smem:[#allocation0]]
  $region46: #{tpu_custom_call.1} parent=0
    _
  %s11 = ssub.s32 1, %s9
  %s12 = scalar_select 0, %s11, %s9
  $region1: #{tpu_custom_call.1} parent=0
    #allocation2 [shape = 'u8[512]{0}', space=smem, size = 0x200, scoped, tag = 'input window, operand 0, single buffered']
    #allocation3 [shape = 's32[1]{0}', space=sflag, size = 0x4, scoped, tag = 'scoped memory for tpu_custom_call.1']
    #allocation4 [shape = 's32[1]{0}', space=sflag, size = 0x4, scoped, tag = 'scoped memory for tpu_custom_call.1']
    #allocation5 [shape = 'u8[4096]{0}', space=vmem, size = 0x1000, scoped, tag = 'output window, operand 0, single buffered']
    %13 = vsyncpa [#allocation4], 0
    %14 = vsyncpa [#allocation3], 0
    // Predicated region
    $region2: #{tpu_custom_call.1} parent=1 // pred_check
      _
    $region3: #{tpu_custom_call.1} parent=1 // pred_check_branch
      %16 = sbr.rel (0) target = $region5
    $region4: #{tpu_custom_call.1} parent=1 // pred_region
      %s18 = ssub.s32 16, 16
      %19 = vsyncadd [#allocation4], %s18
      %s21 = sshll.u32 %s0, 4
      %s22 = int_to_ptr.vmem [resolvable:$true] %s21
      %24 = dma.vmem_to_smem %s22, 16, [#allocation2], [#allocation4]
    $region5: #{tpu_custom_call.1} parent=1 // pred_fallthru
      _
    // Predicated region
    $region6: #{tpu_custom_call.1} parent=1 // pred_check
      _
    $region7: #{tpu_custom_call.1} parent=1 // pred_check_branch
      %26 = sbr.rel (0) target = $region9
    $region8: #{tpu_custom_call.1} parent=1 // pred_region
      _
    $region9: #{tpu_custom_call.1} parent=1 // pred_fallthru
      _
    // Predicated region
    $region10: #{tpu_custom_call.1} parent=1 // pred_check
      _
    $region11: #{tpu_custom_call.1} parent=1 // pred_check_branch
      %28 = sbr.rel (0) target = $region13
    $region12: #{tpu_custom_call.1} parent=1 // pred_region
      _
    $region13: #{tpu_custom_call.1} parent=1 // pred_fallthru
      _
    // Predicated region
    $region14: #{tpu_custom_call.1} parent=1 // pred_check
      _
    $region15: #{tpu_custom_call.1} parent=1 // pred_check_branch
      %30 = sbr.rel (0) target = $region17
    $region16: #{tpu_custom_call.1} parent=1 // pred_region
      _
    $region17: #{tpu_custom_call.1} parent=1 // pred_fallthru
      _
    // Predicated region
    $region18: #{tpu_custom_call.1} parent=1 // pred_check
      _
    $region19: #{tpu_custom_call.1} parent=1 // pred_check_branch
      %32 = sbr.rel (0) target = $region21
    $region20: #{tpu_custom_call.1} parent=1 // pred_region
      _
    $region21: #{tpu_custom_call.1} parent=1 // pred_fallthru
      _
    // Predicated region
    $region22: #{tpu_custom_call.1} parent=1 // pred_check
      _
    $region23: #{tpu_custom_call.1} parent=1 // pred_check_branch
      %34 = sbr.rel (0) target = $region25
    $region24: #{tpu_custom_call.1} parent=1 // pred_region
      _
    $region25: #{tpu_custom_call.1} parent=1 // pred_fallthru
      _
    // Predicated region
    $region26: #{tpu_custom_call.1} parent=1 // pred_check
      _
    $region27: #{tpu_custom_call.1} parent=1 // pred_check_branch
      %36 = sbr.rel (0) target = $region29
    $region28: #{tpu_custom_call.1} parent=1 // pred_region
      _
    $region29: #{tpu_custom_call.1} parent=1 // pred_fallthru
      _
    // Predicated region
    $region30: #{tpu_custom_call.1} parent=1 // pred_check
      _
    $region31: #{tpu_custom_call.1} parent=1 // pred_check_branch
      %38 = sbr.rel (0) target = $region33
    $region32: #{tpu_custom_call.1} parent=1 // pred_region
      _
    $region33: #{tpu_custom_call.1} parent=1 // pred_fallthru
      _
    // Predicated region
    $region34: #{tpu_custom_call.1} parent=1 // pred_check
      _
    $region35: #{tpu_custom_call.1} parent=1 // pred_check_branch
      %40 = sbr.rel (0) target = $region37
    $region36: #{tpu_custom_call.1} parent=1 // pred_region
      %41 = dma.done [#allocation4], 16
    $region37: #{tpu_custom_call.1} parent=1 // pred_fallthru
      _
    %42 = sfence
    %s43 = sld [smem:[#allocation2]]
    %s44 = sld [smem:[#allocation2 + $0x1]]
    %s45 = sld [smem:[#allocation2 + $0x2]]
    %s46 = smul.f32 %s45, %s45
    %s47 = sadd.f32 %s46, 1.0
    %v48 = vstv %s47
    %v49 = vrsqrt.pop %v48
    %v50 = vmul.f32 %v48, %v49
    %vm51 = vcmp.eq.f32.partialorder %v48, inf
    %v52 = vsel %vm51, %v48, %v50
    %vm53 = vcmp.eq.f32.partialorder %v48, 0.0
    %v54 = vand.u32 %v48, 2147483648
    %v55 = vsel %vm53, %v54, %v52
    %s56 = vtos %v55
    %v57 = vstv %s56
    %v58 = vrcp.pop %v57
    %s59 = vtos %v58
    %v60 = vld [vmem:[%s5] sm:$0xf]
    %v61 = vstv %s59
    %v62 = vmul.f32 %v61, %v60
    %s63 = smul.f32 %s59, %s44
    %v64 = vld [vmem:[%s6] sm:$0xf]
    %v65 = vstv %s63
    %v66 = vmul.f32 %v65, %v64
    %s67 = ssub.f32 1.0, %s44
    %s68 = smul.f32 %s59, %s67
    %v69 = vstv %s68
    %v70 = vmul.f32 %v69, %v64
    %v71 = vld [vmem:[%s1] sm:$0xff]
    %v72 = vld [vmem:[%s2] sm:$0xff]
    %v74 = vcombine.high %v72, %v72
    %vm75 = vcmask 31744
    %v77 = vsel %vm75, %v66, 0
    %vm79 = vcmask 1043456
    %v80 = vsel %vm79, %v72, 0
    %v82 = vsel %vm79, %v74, 0
    %84 = vmatprep.subr.mxu0 %v82
    %85 = vmatpush1.msra.mxu0 %v80
    %86 = vmatprep.subr.mxu0 0.0
    %87 = vmatpush1.msra.mxu0 0.0
    %88 = vmatprep.subr.mxu0 0.0
    %89 = vmatpush1.msra.mxu0 0.0
    %90 = vmatprep.subr.mxu0 0.0
    %91 = vmatpush1.msra.mxu0 0.0
    %92 = vmatprep.subr.mxu0 0.0
    %93 = vmatpush1.msra.mxu0 0.0
    %94 = vmatprep.subr.mxu0 0.0
    %95 = vmatpush1.msra.mxu0 0.0
    %96 = vmatprep.subr.mxu0 0.0
    %97 = vmatpush1.msra.mxu0 0.0
    %98 = vmatprep.subr.mxu0 0.0
    %99 = vmatpush1.msra.mxu0 0.0
    %100 = vmatprep.subr.mxu0 0.0
    %101 = vmatpush1.msra.mxu0 0.0
    %102 = vmatprep.subr.mxu0 0.0
    %103 = vmatpush1.msra.mxu0 0.0
    %104 = vmatprep.subr.mxu0 0.0
    %105 = vmatpush1.msra.mxu0 0.0
    %106 = vmatprep.subr.mxu0 0.0
    %107 = vmatpush1.msra.mxu0 0.0
    %108 = vmatprep.subr.mxu0 0.0
    %109 = vmatpush1.msra.mxu0 0.0
    %110 = vmatprep.subr.mxu0 0.0
    %111 = vmatpush1.msra.mxu0 0.0
    %112 = vmatprep.subr.mxu0 0.0
    %113 = vmatpush1.msra.mxu0 0.0
    %114 = vmatprep.subr.mxu0 0.0
    %115 = vmatpush1.msra.mxu0 0.0
    %116 = vmatprep.subr.mxu0 0.0
    %117 = vmatpush1.msra.mxu0 0.0
    %118 = vmatprep.subr.mxu0 0.0
    %119 = vmatpush1.msra.mxu0 0.0
    %120 = vmatprep.subr.mxu0 0.0
    %121 = vmatpush1.msra.mxu0 0.0
    %122 = vmatprep.subr.mxu0 0.0
    %123 = vmatpush1.msra.mxu0 0.0
    %124 = vmatprep.subr.mxu0 0.0
    %125 = vmatpush1.msra.mxu0 0.0
    %126 = vmatprep.subr.mxu0 0.0
    %127 = vmatpush1.msra.mxu0 0.0
    %128 = vmatprep.subr.mxu0 0.0
    %129 = vmatpush1.msra.mxu0 0.0
    %130 = vmatprep.subr.mxu0 0.0
    %131 = vmatpush1.msra.mxu0 0.0
    %132 = vmatprep.subr.mxu0 0.0
    %133 = vmatpush1.msra.mxu0 0.0
    %134 = vmatprep.subr.mxu0 0.0
    %135 = vmatpush1.msra.mxu0 0.0
    %136 = vmatprep.subr.mxu0 0.0
    %137 = vmatpush1.msra.mxu0 0.0
    %138 = vmatprep.subr.mxu0 0.0
    %139 = vmatpush1.msra.mxu0 0.0
    %140 = vmatprep.subr.mxu0 0.0
    %141 = vmatpush1.msra.mxu0 0.0
    %142 = vmatprep.subr.mxu0 0.0
    %143 = vmatpush1.msra.mxu0 0.0
    %144 = vmatprep.subr.mxu0 0.0
    %145 = vmatpush1.msra.mxu0 0.0
    %146 = vmatprep.subr.mxu0 0.0
    %147 = vmatpush1.msra.mxu0 0.0
    %148 = vmatprep.mubr.f32.mxu0 0.0
    %149 = vmatmul.mubr.f32.gmra.mrb[0].mxu0 %v77
    %v150 = vpop.f32.mrb[0].mxu0
    %v151 = vadd.f32 0.0, %v150
    %v152 = vpop.f32.mrb[0].mxu0
    %v153 = vadd.f32 0.0, %v152
    %154 = vdwg.mxu0
    %v156 = vcombine.high %v71, %v71
    %v158 = vsel %vm75, %v62, 0
    %v160 = vsel %vm79, %v71, 0
    %v162 = vsel %vm79, %v156, 0
    %164 = vmatprep.subr.mxu0 %v162
    %165 = vmatpush1.msra.mxu0 %v160
    %166 = vmatprep.subr.mxu0 0.0
    %167 = vmatpush1.msra.mxu0 0.0
    %168 = vmatprep.subr.mxu0 0.0
    %169 = vmatpush1.msra.mxu0 0.0
    %170 = vmatprep.subr.mxu0 0.0
    %171 = vmatpush1.msra.mxu0 0.0
    %172 = vmatprep.subr.mxu0 0.0
    %173 = vmatpush1.msra.mxu0 0.0
    %174 = vmatprep.subr.mxu0 0.0
    %175 = vmatpush1.msra.mxu0 0.0
    %176 = vmatprep.subr.mxu0 0.0
    %177 = vmatpush1.msra.mxu0 0.0
    %178 = vmatprep.subr.mxu0 0.0
    %179 = vmatpush1.msra.mxu0 0.0
    %180 = vmatprep.subr.mxu0 0.0
    %181 = vmatpush1.msra.mxu0 0.0
    %182 = vmatprep.subr.mxu0 0.0
    %183 = vmatpush1.msra.mxu0 0.0
    %184 = vmatprep.subr.mxu0 0.0
    %185 = vmatpush1.msra.mxu0 0.0
    %186 = vmatprep.subr.mxu0 0.0
    %187 = vmatpush1.msra.mxu0 0.0
    %188 = vmatprep.subr.mxu0 0.0
    %189 = vmatpush1.msra.mxu0 0.0
    %190 = vmatprep.subr.mxu0 0.0
    %191 = vmatpush1.msra.mxu0 0.0
    %192 = vmatprep.subr.mxu0 0.0
    %193 = vmatpush1.msra.mxu0 0.0
    %194 = vmatprep.subr.mxu0 0.0
    %195 = vmatpush1.msra.mxu0 0.0
    %196 = vmatprep.subr.mxu0 0.0
    %197 = vmatpush1.msra.mxu0 0.0
    %198 = vmatprep.subr.mxu0 0.0
    %199 = vmatpush1.msra.mxu0 0.0
    %200 = vmatprep.subr.mxu0 0.0
    %201 = vmatpush1.msra.mxu0 0.0
    %202 = vmatprep.subr.mxu0 0.0
    %203 = vmatpush1.msra.mxu0 0.0
    %204 = vmatprep.subr.mxu0 0.0
    %205 = vmatpush1.msra.mxu0 0.0
    %206 = vmatprep.subr.mxu0 0.0
    %207 = vmatpush1.msra.mxu0 0.0
    %208 = vmatprep.subr.mxu0 0.0
    %209 = vmatpush1.msra.mxu0 0.0
    %210 = vmatprep.subr.mxu0 0.0
    %211 = vmatpush1.msra.mxu0 0.0
    %212 = vmatprep.subr.mxu0 0.0
    %213 = vmatpush1.msra.mxu0 0.0
    %214 = vmatprep.subr.mxu0 0.0
    %215 = vmatpush1.msra.mxu0 0.0
    %216 = vmatprep.subr.mxu0 0.0
    %217 = vmatpush1.msra.mxu0 0.0
    %218 = vmatprep.subr.mxu0 0.0
    %219 = vmatpush1.msra.mxu0 0.0
    %220 = vmatprep.subr.mxu0 0.0
    %221 = vmatpush1.msra.mxu0 0.0
    %222 = vmatprep.subr.mxu0 0.0
    %223 = vmatpush1.msra.mxu0 0.0
    %224 = vmatprep.subr.mxu0 0.0
    %225 = vmatpush1.msra.mxu0 0.0
    %226 = vmatprep.subr.mxu0 0.0
    %227 = vmatpush1.msra.mxu0 0.0
    %228 = vmatprep.mubr.f32.mxu0 0.0
    %229 = vmatmul.mubr.f32.gmra.mrb[0].mxu0 %v158
    %v230 = vpop.f32.mrb[0].mxu0
    %v231 = vadd.f32 %v151, %v230
    %v232 = vpop.f32.mrb[0].mxu0
    %v233 = vadd.f32 %v153, %v232
    %234 = vdwg.mxu0
    %v235 = vld [vmem:[%s3] sm:$0xff]
    %v237 = vcombine.high %v235, %v235
    %v239 = vsel %vm75, %v70, 0
    %v241 = vsel %vm79, %v235, 0
    %v243 = vsel %vm79, %v237, 0
    %245 = vmatprep.subr.mxu0 %v243
    %246 = vmatpush1.msra.mxu0 %v241
    %247 = vmatprep.subr.mxu0 0.0
    %248 = vmatpush1.msra.mxu0 0.0
    %249 = vmatprep.subr.mxu0 0.0
    %250 = vmatpush1.msra.mxu0 0.0
    %251 = vmatprep.subr.mxu0 0.0
    %252 = vmatpush1.msra.mxu0 0.0
    %253 = vmatprep.subr.mxu0 0.0
    %254 = vmatpush1.msra.mxu0 0.0
    %255 = vmatprep.subr.mxu0 0.0
    %256 = vmatpush1.msra.mxu0 0.0
    %257 = vmatprep.subr.mxu0 0.0
    %258 = vmatpush1.msra.mxu0 0.0
    %259 = vmatprep.subr.mxu0 0.0
    %260 = vmatpush1.msra.mxu0 0.0
    %261 = vmatprep.subr.mxu0 0.0
    %262 = vmatpush1.msra.mxu0 0.0
    %263 = vmatprep.subr.mxu0 0.0
    %264 = vmatpush1.msra.mxu0 0.0
    %265 = vmatprep.subr.mxu0 0.0
    %266 = vmatpush1.msra.mxu0 0.0
    %267 = vmatprep.subr.mxu0 0.0
    %268 = vmatpush1.msra.mxu0 0.0
    %269 = vmatprep.subr.mxu0 0.0
    %270 = vmatpush1.msra.mxu0 0.0
    %271 = vmatprep.subr.mxu0 0.0
    %272 = vmatpush1.msra.mxu0 0.0
    %273 = vmatprep.subr.mxu0 0.0
    %274 = vmatpush1.msra.mxu0 0.0
    %275 = vmatprep.subr.mxu0 0.0
    %276 = vmatpush1.msra.mxu0 0.0
    %277 = vmatprep.subr.mxu0 0.0
    %278 = vmatpush1.msra.mxu0 0.0
    %279 = vmatprep.subr.mxu0 0.0
    %280 = vmatpush1.msra.mxu0 0.0
    %281 = vmatprep.subr.mxu0 0.0
    %282 = vmatpush1.msra.mxu0 0.0
    %283 = vmatprep.subr.mxu0 0.0
    %284 = vmatpush1.msra.mxu0 0.0
    %285 = vmatprep.subr.mxu0 0.0
    %286 = vmatpush1.msra.mxu0 0.0
    %287 = vmatprep.subr.mxu0 0.0
    %288 = vmatpush1.msra.mxu0 0.0
    %289 = vmatprep.subr.mxu0 0.0
    %290 = vmatpush1.msra.mxu0 0.0
    %291 = vmatprep.subr.mxu0 0.0
    %292 = vmatpush1.msra.mxu0 0.0
    %293 = vmatprep.subr.mxu0 0.0
    %294 = vmatpush1.msra.mxu0 0.0
    %295 = vmatprep.subr.mxu0 0.0
    %296 = vmatpush1.msra.mxu0 0.0
    %297 = vmatprep.subr.mxu0 0.0
    %298 = vmatpush1.msra.mxu0 0.0
    %299 = vmatprep.subr.mxu0 0.0
    %300 = vmatpush1.msra.mxu0 0.0
    %301 = vmatprep.subr.mxu0 0.0
    %302 = vmatpush1.msra.mxu0 0.0
    %303 = vmatprep.subr.mxu0 0.0
    %304 = vmatpush1.msra.mxu0 0.0
    %305 = vmatprep.subr.mxu0 0.0
    %306 = vmatpush1.msra.mxu0 0.0
    %307 = vmatprep.subr.mxu0 0.0
    %308 = vmatpush1.msra.mxu0 0.0
    %309 = vmatprep.mubr.f32.mxu0 0.0
    %310 = vmatmul.mubr.f32.gmra.mrb[0].mxu0 %v239
    %v311 = vpop.f32.mrb[0].mxu0
    %v312 = vadd.f32 0.0, %v311
    %v313 = vpop.f32.mrb[0].mxu0
    %v314 = vadd.f32 0.0, %v313
    %315 = vdwg.mxu0
    %v316 = vadd.f32 %v231, %v312
    %v317 = vadd.f32 %v233, %v314
    %v318 = vld [vmem:[%s4] sm:$0xff]
    %v319 = vld [vmem:[%s4 + $0x8] sm:$0xff]
    %v320 = vld [vmem:[%s4 + $0x10] sm:$0xff]
    %v321 = vld [vmem:[%s4 + $0x18] sm:$0xff]
    %vm322 = vcmask 64512
    %v323 = vsel %vm322, %v318, 0.0
    %324 = vadd.xlane.f32.xlu0 %v323
    %v325 = vpop.xlane.xlu0 %324
    %v326 = vsel %vm322, %v319, 0.0
    %327 = vadd.xlane.f32.xlu0 %v326
    %v328 = vpop.xlane.xlu0 %327
    %v329 = vsel %vm322, %v320, 0.0
    %330 = vadd.xlane.f32.xlu0 %v329
    %v331 = vpop.xlane.xlu0 %330
    %v332 = vsel %vm322, %v321, 0.0
    %333 = vadd.xlane.f32.xlu0 %v332
    %v334 = vpop.xlane.xlu0 %333
    %v335 = vrcp.pop 8.0
    %v336 = vmul.f32 %v325, %v335
    %v337 = vmul.f32 %v328, %v335
    %v338 = vmul.f32 %v331, %v335
    %v339 = vmul.f32 %v334, %v335
    %s340 = scalar_lea.vmem %s4, 32
    %v341 = vld [vmem:[%s340] sm:$0xff]
    %v342 = vld [vmem:[%s340 + $0x8] sm:$0xff]
    %v343 = vld [vmem:[%s340 + $0x10] sm:$0xff]
    %v344 = vld [vmem:[%s340 + $0x18] sm:$0xff]
    %v345 = vsel %vm322, %v341, 0.0
    %346 = vadd.xlane.f32.xlu0 %v345
    %v347 = vpop.xlane.xlu0 %346
    %v348 = vsel %vm322, %v342, 0.0
    %349 = vadd.xlane.f32.xlu0 %v348
    %v350 = vpop.xlane.xlu0 %349
    %v351 = vsel %vm322, %v343, 0.0
    %352 = vadd.xlane.f32.xlu0 %v351
    %v353 = vpop.xlane.xlu0 %352
    %v354 = vsel %vm322, %v344, 0.0
    %355 = vadd.xlane.f32.xlu0 %v354
    %v356 = vpop.xlane.xlu0 %355
    %v357 = vmul.f32 %v347, %v335
    %v358 = vmul.f32 %v350, %v335
    %v359 = vmul.f32 %v353, %v335
    %v360 = vmul.f32 %v356, %v335
    %v361 = vstv %s43
    %v362 = vmul.f32 %v361, %v336
    %v363 = vmul.f32 %v361, %v337
    %v364 = vmul.f32 %v361, %v338
    %v365 = vmul.f32 %v361, %v339
    %s366 = ssub.f32 1.0, %s43
    %v367 = vstv %s366
    %v368 = vmul.f32 %v367, %v357
    %v369 = vmul.f32 %v367, %v358
    %v370 = vmul.f32 %v367, %v359
    %v371 = vmul.f32 %v367, %v360
    %v372 = vadd.f32 %v362, %v368
    %v373 = vadd.f32 %v363, %v369
    %v374 = vadd.f32 %v364, %v370
    %v375 = vadd.f32 %v365, %v371
    %v376 = vld [vmem:[%s7] sm:$0xf]
    %vm377 = vcmask 261120
    %v379 = vsel %vm377, %v376, 0
    %381 = vmatprep.subr.mxu0 0.0
    %382 = vmatpush1.msra.mxu0 %v372
    %383 = vmatprep.subr.mxu0 0.0
    %384 = vmatpush1.msra.mxu0 %v373
    %385 = vmatprep.subr.mxu0 0.0
    %386 = vmatpush1.msra.mxu0 %v374
    %387 = vmatprep.subr.mxu0 0.0
    %388 = vmatpush1.msra.mxu0 %v375
    %389 = vmatprep.subr.mxu0 0.0
    %390 = vmatpush1.msra.mxu0 0.0
    %391 = vmatprep.subr.mxu0 0.0
    %392 = vmatpush1.msra.mxu0 0.0
    %393 = vmatprep.subr.mxu0 0.0
    %394 = vmatpush1.msra.mxu0 0.0
    %395 = vmatprep.subr.mxu0 0.0
    %396 = vmatpush1.msra.mxu0 0.0
    %397 = vmatprep.subr.mxu0 0.0
    %398 = vmatpush1.msra.mxu0 0.0
    %399 = vmatprep.subr.mxu0 0.0
    %400 = vmatpush1.msra.mxu0 0.0
    %401 = vmatprep.subr.mxu0 0.0
    %402 = vmatpush1.msra.mxu0 0.0
    %403 = vmatprep.subr.mxu0 0.0
    %404 = vmatpush1.msra.mxu0 0.0
    %405 = vmatprep.subr.mxu0 0.0
    %406 = vmatpush1.msra.mxu0 0.0
    %407 = vmatprep.subr.mxu0 0.0
    %408 = vmatpush1.msra.mxu0 0.0
    %409 = vmatprep.subr.mxu0 0.0
    %410 = vmatpush1.msra.mxu0 0.0
    %411 = vmatprep.subr.mxu0 0.0
    %412 = vmatpush1.msra.mxu0 0.0
    %413 = vmatprep.subr.mxu0 0.0
    %414 = vmatpush1.msra.mxu0 0.0
    %415 = vmatprep.subr.mxu0 0.0
    %416 = vmatpush1.msra.mxu0 0.0
    %417 = vmatprep.subr.mxu0 0.0
    %418 = vmatpush1.msra.mxu0 0.0
    %419 = vmatprep.subr.mxu0 0.0
    %420 = vmatpush1.msra.mxu0 0.0
    %421 = vmatprep.subr.mxu0 0.0
    %422 = vmatpush1.msra.mxu0 0.0
    %423 = vmatprep.subr.mxu0 0.0
    %424 = vmatpush1.msra.mxu0 0.0
    %425 = vmatprep.subr.mxu0 0.0
    %426 = vmatpush1.msra.mxu0 0.0
    %427 = vmatprep.subr.mxu0 0.0
    %428 = vmatpush1.msra.mxu0 0.0
    %429 = vmatprep.subr.mxu0 0.0
    %430 = vmatpush1.msra.mxu0 0.0
    %431 = vmatprep.subr.mxu0 0.0
    %432 = vmatpush1.msra.mxu0 0.0
    %433 = vmatprep.subr.mxu0 0.0
    %434 = vmatpush1.msra.mxu0 0.0
    %435 = vmatprep.subr.mxu0 0.0
    %436 = vmatpush1.msra.mxu0 0.0
    %437 = vmatprep.subr.mxu0 0.0
    %438 = vmatpush1.msra.mxu0 0.0
    %439 = vmatprep.subr.mxu0 0.0
    %440 = vmatpush1.msra.mxu0 0.0
    %441 = vmatprep.subr.mxu0 0.0
    %442 = vmatpush1.msra.mxu0 0.0
    %443 = vmatprep.subr.mxu0 0.0
    %444 = vmatpush1.msra.mxu0 0.0
    %445 = vmatprep.mubr.f32.mxu0 0.0
    %446 = vmatmul.mubr.f32.gmra.mrb[0].mxu0 %v379
    %v447 = vpop.f32.mrb[0].mxu0
    %v448 = vadd.f32 0.0, %v447
    %v449 = vpop.f32.mrb[0].mxu0
    %450 = vdwg.mxu0
    %452 = vset.pattern.permute.xlu0 0
    %453 = vperm.xlu0 %452, %v448
    %v454 = vpop.permute.xlu0 %453
    %v456 = vadd.f32 %v316, %v454
    %v457 = vadd.f32 %v317, %v454
    %v460 = vcombine.low %v456, %v457
    %462 = vst [vmem:[#allocation5] sm:$0xff] %v460
    // Predicated region
    $region38: #{tpu_custom_call.1} parent=1 // pred_check
      _
    $region39: #{tpu_custom_call.1} parent=1 // pred_check_branch
      %464 = sbr.rel (0) target = $region41
    $region40: #{tpu_custom_call.1} parent=1 // pred_region
      %s466 = ssub.s32 128, 128
      %467 = vsyncadd [#allocation3], %s466
      %s469 = sshll.u32 [#allocation5], 4
      %s470 = int_to_ptr.vmem [resolvable:$true] %s469
      %472 = dma.vmem_to_hbm [thread:$0]  %s470, 128, %s8, [#allocation3]
    $region41: #{tpu_custom_call.1} parent=1 // pred_fallthru
      _
    // Predicated region
    $region42: #{tpu_custom_call.1} parent=1 // pred_check
      _
    $region43: #{tpu_custom_call.1} parent=1 // pred_check_branch
      %474 = sbr.rel (0) target = $region45
    $region44: #{tpu_custom_call.1} parent=1 // pred_region
      %475 = dma.done [#allocation3], 128
    $region45: #{tpu_custom_call.1} parent=1 // pred_fallthru
      _
    %476 = vsyncpa [#allocation3], 1
    %477 = vsyncpa [#allocation4], 1

</llo_original>
